<compile_context>
chip_gen: v7x
topology: tpu7x:2x2x1
jax: 0.10.0
libtpu: 0.0.40
codegen_flags: <defaults>
</compile_context>

<pallas_src>
import functools

import jax
import jax.numpy as jnp
from jax import lax
from jax.experimental import pallas as pl
from jax.experimental.pallas import tpu as pltpu

POOL = 3  # MaxPool2d(3): kernel == stride == 3


def _round_up(x, m):
    return ((x + m - 1) // m) * m


# ----------------------------------------------------------------------------
# Kernels
# ----------------------------------------------------------------------------
def _conv_act_kernel(*refs, static_slope):
    """Single im2col matmul + bias + leaky/prelu epilogue.

    x_ref: (M_pad, K_pad)   VMEM   im2col patches (zero-padded)
    w_ref: (K_pad, N_pad)   VMEM   flattened conv weights (zero-padded)
    b_ref: (1, N_pad)       VMEM   bias (zero-padded)
    [slope_ref: (1,)        SMEM   PReLU scalar, only when static_slope is None]
    o_ref: (M_pad, N_pad)   VMEM   lane-dense output slab
    """
    if static_slope is None:
        x_ref, w_ref, b_ref, slope_ref, o_ref = refs
        slope = slope_ref[0]
    else:
        x_ref, w_ref, b_ref, o_ref = refs
        slope = jnp.float32(static_slope)

    acc = jnp.dot(x_ref[...], w_ref[...], preferred_element_type=jnp.float32)
    acc = acc + b_ref[...]                         # (1, N_pad) broadcast
    acc = jnp.where(acc >= 0, acc, slope * acc)    # LeakyReLU / PReLU(scalar)
    o_ref[...] = acc.astype(o_ref.dtype)


def _pool_act_kernel(*refs, n_taps, static_slope):
    """MaxPool via a VPU maximum tree over the leading tap axis + activation.

    x_ref: (n_taps, R, L)   VMEM   tap k of every pooling window
    [slope_ref: (1,)        SMEM   PReLU scalar, only when static_slope is None]
    o_ref: (R, L)           VMEM
    """
    if static_slope is None:
        x_ref, slope_ref, o_ref = refs
        slope = slope_ref[0]
    else:
        x_ref, o_ref = refs
        slope = jnp.float32(static_slope)

    m = x_ref[0]
    for k in range(1, n_taps):                     # static unroll: 8 VPU maxes
        m = jnp.maximum(m, x_ref[k])
    m = jnp.where(m >= 0, m, slope * m)
    o_ref[...] = m.astype(o_ref.dtype)


# ----------------------------------------------------------------------------
# Wrappers (pallas_call plumbing)
# ----------------------------------------------------------------------------
@functools.partial(jax.jit, static_argnames=("static_slope",))
def conv2d_act(x_nchw, w_hwio, bias, slope=None, static_slope=None):
    N, Cin, H, W = x_nchw.shape
    KH, KW, _, Cout = w_hwio.shape
    Ho, Wo = H - KH + 1, W - KW + 1

    M = N * Ho * Wo                    # batch folded into matmul rows
    K = KH * KW * Cin
    M_pad = _round_up(M, 8)
    K_pad = _round_up(K, 128)
    N_pad = _round_up(Cout, 128)       # lane-dense output columns

    # im2col in the wrapper (layout plumbing; compute stays in the kernel).
    x_nhwc = jnp.transpose(x_nchw, (0, 2, 3, 1)).astype(jnp.float32)
    cols = [x_nhwc[:, kh:kh + Ho, kw:kw + Wo, :]
            for kh in range(KH) for kw in range(KW)]
    patches = jnp.concatenate(cols, axis=-1).reshape(M, K)
    patches = jnp.pad(patches, ((0, M_pad - M), (0, K_pad - K)))

    w2 = w_hwio.reshape(K, Cout).astype(jnp.float32)
    w2 = jnp.pad(w2, ((0, K_pad - K), (0, N_pad - Cout)))
    b2 = jnp.pad(bias.astype(jnp.float32), (0, N_pad - Cout)).reshape(1, N_pad)

    in_specs = [pl.BlockSpec(memory_space=pltpu.MemorySpace.VMEM)] * 3
    args = [patches, w2, b2]
    if static_slope is None:           # PReLU: learnable scalar via SMEM
        in_specs.append(pl.BlockSpec(memory_space=pltpu.MemorySpace.SMEM))
        args.append(jnp.asarray(slope, jnp.float32).reshape(1))

    out = pl.pallas_call(
        functools.partial(_conv_act_kernel, static_slope=static_slope),
        out_shape=jax.ShapeDtypeStruct((M_pad, N_pad), jnp.float32),
        in_specs=in_specs,
        out_specs=pl.BlockSpec(memory_space=pltpu.MemorySpace.VMEM),
    )(*args)

    out = out[:M, :Cout].reshape(N, Ho, Wo, Cout)
    return jnp.transpose(out, (0, 3, 1, 2)).astype(x_nchw.dtype)   # back to NCHW


@functools.partial(jax.jit, static_argnames=("static_slope",))
def maxpool_act(x_nchw, slope=None, static_slope=None):
    N, C, H, W = x_nchw.shape
    Ho = (H - POOL) // POOL + 1
    Wo = (W - POOL) // POOL + 1

    # Stack the POOL*POOL window taps on the leading axis (no 6-D transpose,
    # no cross-sublane reduce in the kernel).  Each tap is (N*C, Ho*Wo).
    taps = [
        x_nchw[:, :, kh:kh + POOL * Ho:POOL, kw:kw + POOL * Wo:POOL]
        .reshape(N * C, Ho * Wo)
        for kh in range(POOL) for kw in range(POOL)
    ]
    xw = jnp.stack(taps, axis=0).astype(jnp.float32)   # (9, N*C, Ho*Wo)

    in_specs = [pl.BlockSpec(memory_space=pltpu.MemorySpace.VMEM)]
    args = [xw]
    if static_slope is None:
        in_specs.append(pl.BlockSpec(memory_space=pltpu.MemorySpace.SMEM))
        args.append(jnp.asarray(slope, jnp.float32).reshape(1))

    out = pl.pallas_call(
        functools.partial(_pool_act_kernel, n_taps=POOL * POOL,
                          static_slope=static_slope),
        out_shape=jax.ShapeDtypeStruct((N * C, Ho * Wo), jnp.float32),
        in_specs=in_specs,
        out_specs=pl.BlockSpec(memory_space=pltpu.MemorySpace.VMEM),
    )(*args)

    return out.reshape(N, C, Ho, Wo).astype(x_nchw.dtype)          # already NCHW


# ----------------------------------------------------------------------------
# Module-equivalent container
# ----------------------------------------------------------------------------
class MyModuledictPallas:
    def __init__(self, key):
        k_w, k_b = jax.random.split(key)
        fan_in = 10 * 3 * 3
        bound = 1.0 / (fan_in ** 0.5)
        # Conv2d(10, 10, 3) parameters, stored HWIO for the NHWC/im2col kernel.
        self.conv_w = jax.random.uniform(k_w, (3, 3, 10, 10), jnp.float32,
                                         -bound, bound)
        self.conv_b = jax.random.uniform(k_b, (10,), jnp.float32, -bound, bound)
        # Activations: LeakyReLU slope (constant 0.01), PReLU weight (init 0.25).
        self.lrelu_slope = 0.01           # compile-time constant
        self.prelu_a = jnp.float32(0.25)  # learnable scalar -> SMEM

    def __call__(self, x, choice, act):
        if act == "lrelu":
            slope, static_slope = None, self.lrelu_slope
        elif act == "prelu":
            slope, static_slope = self.prelu_a, None
        else:
            raise ValueError(f"unknown act {act!r}")
        if choice == "conv":
            return conv2d_act(x, self.conv_w, self.conv_b, slope, static_slope)
        if choice == "pool":
            return maxpool_act(x, slope, static_slope)
        raise ValueError(f"unknown choice {choice!r}")


# ----------------------------------------------------------------------------
# Main
# ----------------------------------------------------------------------------
if __name__ == "__main__":
    key = jax.random.PRNGKey(0)
    k_x, k_m = jax.random.split(key)

    # NCHW input; Conv2d(10, 10, 3) needs 10 input channels, spatial 10x10.
    x = jax.random.normal(k_x, (2, 10, 10, 10), jnp.float32)
    model = MyModuledictPallas(k_m)

    # Run all four (choice, act) combinations once.
    y_conv_l = jax.block_until_ready(model(x, "conv", "lrelu"))
    y_conv_p = jax.block_until_ready(model(x, "conv", "prelu"))
    y_pool_l = jax.block_until_ready(model(x, "pool", "lrelu"))
    y_pool_p = jax.block_until_ready(model(x, "pool", "prelu"))
    assert y_conv_l.shape == (2, 10, 8, 8)
    assert y_pool_p.shape == (2, 10, 3, 3)

    # Pure-JAX references for correctness.
    conv_ref = lax.conv_general_dilated(
        jnp.transpose(x, (0, 2, 3, 1)), model.conv_w,
        window_strides=(1, 1), padding="VALID",
        dimension_numbers=("NHWC", "HWIO", "NHWC"),
        precision=lax.Precision.HIGHEST) + model.conv_b
    conv_ref = jnp.transpose(conv_ref, (0, 3, 1, 2))
    ref_cl = jnp.where(conv_ref >= 0, conv_ref, 0.01 * conv_ref)
    ref_cp = jnp.where(conv_ref >= 0, conv_ref, model.prelu_a * conv_ref)
    assert jnp.allclose(y_conv_l, ref_cl, rtol=1e-2, atol=1e-2), "conv/lrelu mismatch"
    assert jnp.allclose(y_conv_p, ref_cp, rtol=1e-2, atol=1e-2), "conv/prelu mismatch"

    pool_ref = lax.reduce_window(x, -jnp.inf, lax.max,
                                 (1, 1, POOL, POOL), (1, 1, POOL, POOL), "VALID")
    ref_pl_ = jnp.where(pool_ref >= 0, pool_ref, 0.01 * pool_ref)
    ref_pp = jnp.where(pool_ref >= 0, pool_ref, model.prelu_a * pool_ref)
    assert jnp.allclose(y_pool_l, ref_pl_, rtol=1e-5, atol=1e-5), "pool/lrelu mismatch"
    assert jnp.allclose(y_pool_p, ref_pp, rtol=1e-5, atol=1e-5), "pool/prelu mismatch"

    print("KERNEL_OK")
</pallas_src>

<mosaic_0001>
module attributes {stable_mosaic.version = 11 : i64} {
  func.func @_conv_act_kernel(%arg0: memref<128x128xf32, #tpu.memory_space<vmem>>, %arg1: memref<128x128xf32, #tpu.memory_space<vmem>>, %arg2: memref<1x128xf32, #tpu.memory_space<vmem>>, %arg3: memref<128x128xf32, #tpu.memory_space<vmem>>) attributes {dimension_semantics = [], scalar_prefetch = 0 : i64, scratch_operands = 0 : i64, tpu.core_type = #tpu.core_type<tc>} {
    %c0 = arith.constant 0 : index
    %c0_0 = arith.constant 0 : index
    %0 = vector.load %arg0[%c0, %c0_0] : memref<128x128xf32, #tpu.memory_space<vmem>>, vector<128x128xf32>
    %c0_1 = arith.constant 0 : index
    %c0_2 = arith.constant 0 : index
    %1 = vector.load %arg1[%c0_1, %c0_2] : memref<128x128xf32, #tpu.memory_space<vmem>>, vector<128x128xf32>
    %cst = arith.constant dense<0.000000e+00> : vector<128x128xf32>
    %2 = tpu.matmul %0, %1, %cst {dimension_numbers = #tpu.dot_dimension_numbers<[1], [0], [0], [1], [0, 0, 1, 1], [], []>} : vector<128x128xf32>, vector<128x128xf32>, vector<128x128xf32> -> vector<128x128xf32>
    %c0_3 = arith.constant 0 : index
    %c0_4 = arith.constant 0 : index
    %3 = vector.load %arg2[%c0_3, %c0_4] : memref<1x128xf32, #tpu.memory_space<vmem>>, vector<1x128xf32>
    %4 = vector.broadcast %3 : vector<1x128xf32> to vector<128x128xf32>
    %5 = arith.addf %2, %4 : vector<128x128xf32>
    %cst_5 = arith.constant 0.000000e+00 : f32
    %6 = vector.broadcast %cst_5 : f32 to vector<128x128xf32>
    %7 = arith.cmpf oge, %5, %6 : vector<128x128xf32>
    %cst_6 = arith.constant 0.00999999977 : f32
    %8 = vector.broadcast %cst_6 : f32 to vector<128x128xf32>
    %9 = arith.mulf %8, %5 : vector<128x128xf32>
    %10 = arith.select %7, %5, %9 : vector<128x128xi1>, vector<128x128xf32>
    %c0_7 = arith.constant 0 : index
    %c0_8 = arith.constant 0 : index
    %11 = vector.load %arg3[%c0_7, %c0_8] : memref<128x128xf32, #tpu.memory_space<vmem>>, vector<128x128xf32>
    tpu.vector_store %arg3[%c0_7, %c0_8], %10 {strides = array<i32>} : memref<128x128xf32, #tpu.memory_space<vmem>>, vector<128x128xf32>,
    return
  }
}

</mosaic_0001>

<llo_original>
// kernel: conv2d_act.1
$region0: #{conv2d_act.1}
  #allocation0 [shape = 'u32[]', space=smem, size = 0x4, offset = 0x4, fixed_abs, tag = 'smem constant byte address 0x4 - core index']
  #allocation1 [shape = 'u32[144,128]{1,0:T(1,128)}', space=vmem, size = 0x12000, scoped, tag = 'internal scratch']
  %s0 = inlined_call_operand.vmem [shape: f32[128,128], index: 0, kind: input, shape index: {}]
  %s1 = inlined_call_operand.vmem [shape: f32[128,128], index: 1, kind: input, shape index: {}]
  %s2 = inlined_call_operand.vmem [shape: f32[1,128], index: 2, kind: input, shape index: {}]
  %s3 = inlined_call_operand.hbm [shape: f32[128,128], index: 3, kind: output, shape index: {}]
  %s4 = sld [smem:[#allocation0]]
  $region22: #{conv2d_act.1} parent=0
    _
  %s6 = ssub.s32 1, %s4
  %s7 = scalar_select 0, %s6, %s4
  $region1: #{conv2d_act.1} parent=0
    #allocation2 [shape = 'u8[65536]{0}', space=vmem, size = 0x10000, scoped, tag = 'output window, operand 0, single buffered']
    #allocation3 [shape = 's32[1]{0}', space=sflag, size = 0x4, scoped, tag = 'scoped memory for conv2d_act.1']
    %8 = vsyncpa [#allocation3], 0
    // Predicated region
    $region2: #{conv2d_act.1} parent=1 // pred_check
      _
    $region3: #{conv2d_act.1} parent=1 // pred_check_branch
      %10 = sbr.rel (0) target = $region5
    $region4: #{conv2d_act.1} parent=1 // pred_region
      _
    $region5: #{conv2d_act.1} parent=1 // pred_fallthru
      _
    // Predicated region
    $region6: #{conv2d_act.1} parent=1 // pred_check
      _
    $region7: #{conv2d_act.1} parent=1 // pred_check_branch
      %12 = sbr.rel (0) target = $region9
    $region8: #{conv2d_act.1} parent=1 // pred_region
      _
    $region9: #{conv2d_act.1} parent=1 // pred_fallthru
      _
    // Predicated region
    $region10: #{conv2d_act.1} parent=1 // pred_check
      _
    $region11: #{conv2d_act.1} parent=1 // pred_check_branch
      %14 = sbr.rel (0) target = $region13
    $region12: #{conv2d_act.1} parent=1 // pred_region
      _
    $region13: #{conv2d_act.1} parent=1 // pred_fallthru
      _
    %v15 = vld [vmem:[%s0] sm:$0xff]
    %v16 = vld [vmem:[%s0 + $0x8] sm:$0xff]
    %v17 = vld [vmem:[%s0 + $0x10] sm:$0xff]
    %v18 = vld [vmem:[%s0 + $0x18] sm:$0xff]
    %v19 = vld [vmem:[%s0 + $0x20] sm:$0xff]
    %v20 = vld [vmem:[%s0 + $0x28] sm:$0xff]
    %v21 = vld [vmem:[%s0 + $0x30] sm:$0xff]
    %v22 = vld [vmem:[%s0 + $0x38] sm:$0xff]
    %v23 = vld [vmem:[%s0 + $0x40] sm:$0xff]
    %v24 = vld [vmem:[%s0 + $0x48] sm:$0xff]
    %v25 = vld [vmem:[%s0 + $0x50] sm:$0xff]
    %v26 = vld [vmem:[%s0 + $0x58] sm:$0xff]
    %v27 = vld [vmem:[%s0 + $0x60] sm:$0xff]
    %v28 = vld [vmem:[%s0 + $0x68] sm:$0xff]
    %v29 = vld [vmem:[%s0 + $0x70] sm:$0xff]
    %v30 = vld [vmem:[%s0 + $0x78] sm:$0xff]
    %v31 = vld [vmem:[%s1] sm:$0xff]
    %v32 = vld [vmem:[%s1 + $0x8] sm:$0xff]
    %v33 = vld [vmem:[%s1 + $0x10] sm:$0xff]
    %v34 = vld [vmem:[%s1 + $0x18] sm:$0xff]
    %v35 = vld [vmem:[%s1 + $0x20] sm:$0xff]
    %v36 = vld [vmem:[%s1 + $0x28] sm:$0xff]
    %v37 = vld [vmem:[%s1 + $0x30] sm:$0xff]
    %v38 = vld [vmem:[%s1 + $0x38] sm:$0xff]
    %v39 = vld [vmem:[%s1 + $0x40] sm:$0xff]
    %v40 = vld [vmem:[%s1 + $0x48] sm:$0xff]
    %v41 = vld [vmem:[%s1 + $0x50] sm:$0xff]
    %v42 = vld [vmem:[%s1 + $0x58] sm:$0xff]
    %v43 = vld [vmem:[%s1 + $0x60] sm:$0xff]
    %v44 = vld [vmem:[%s1 + $0x68] sm:$0xff]
    %v45 = vld [vmem:[%s1 + $0x70] sm:$0xff]
    %v46 = vld [vmem:[%s1 + $0x78] sm:$0xff]
    %v47 = vld [vmem:[%s2] sm:$0x1]
    %v49 = vlaneseq
    %v50 = vshrl.u32 %v49, 7
    %v51 = vsub.s32 0, %v50
    %v52 = vrot.slane %v47, %v51
    %54 = vmatprep.subr.mxu0 0.0
    %55 = vmatpush1.msra.mxu0 %v31
    %56 = vmatprep.subr.mxu0 0.0
    %57 = vmatpush1.msra.mxu0 %v32
    %58 = vmatprep.subr.mxu0 0.0
    %59 = vmatpush1.msra.mxu0 %v33
    %60 = vmatprep.subr.mxu0 0.0
    %61 = vmatpush1.msra.mxu0 %v34
    %62 = vmatprep.subr.mxu0 0.0
    %63 = vmatpush1.msra.mxu0 %v35
    %64 = vmatprep.subr.mxu0 0.0
    %65 = vmatpush1.msra.mxu0 %v36
    %66 = vmatprep.subr.mxu0 0.0
    %67 = vmatpush1.msra.mxu0 %v37
    %68 = vmatprep.subr.mxu0 0.0
    %69 = vmatpush1.msra.mxu0 %v38
    %70 = vmatprep.subr.mxu0 0.0
    %71 = vmatpush1.msra.mxu0 %v39
    %72 = vmatprep.subr.mxu0 0.0
    %73 = vmatpush1.msra.mxu0 %v40
    %74 = vmatprep.subr.mxu0 0.0
    %75 = vmatpush1.msra.mxu0 %v41
    %76 = vmatprep.subr.mxu0 0.0
    %77 = vmatpush1.msra.mxu0 %v42
    %78 = vmatprep.subr.mxu0 0.0
    %79 = vmatpush1.msra.mxu0 %v43
    %80 = vmatprep.subr.mxu0 0.0
    %81 = vmatpush1.msra.mxu0 %v44
    %82 = vmatprep.subr.mxu0 0.0
    %83 = vmatpush1.msra.mxu0 %v45
    %84 = vmatprep.subr.mxu0 0.0
    %85 = vmatpush1.msra.mxu0 %v46
    %86 = vmatprep.subr.mxu0 0.0
    %87 = vmatpush1.msra.mxu0 0.0
    %88 = vmatprep.subr.mxu0 0.0
    %89 = vmatpush1.msra.mxu0 0.0
    %90 = vmatprep.subr.mxu0 0.0
    %91 = vmatpush1.msra.mxu0 0.0
    %92 = vmatprep.subr.mxu0 0.0
    %93 = vmatpush1.msra.mxu0 0.0
    %94 = vmatprep.subr.mxu0 0.0
    %95 = vmatpush1.msra.mxu0 0.0
    %96 = vmatprep.subr.mxu0 0.0
    %97 = vmatpush1.msra.mxu0 0.0
    %98 = vmatprep.subr.mxu0 0.0
    %99 = vmatpush1.msra.mxu0 0.0
    %100 = vmatprep.subr.mxu0 0.0
    %101 = vmatpush1.msra.mxu0 0.0
    %102 = vmatprep.subr.mxu0 0.0
    %103 = vmatpush1.msra.mxu0 0.0
    %104 = vmatprep.subr.mxu0 0.0
    %105 = vmatpush1.msra.mxu0 0.0
    %106 = vmatprep.subr.mxu0 0.0
    %107 = vmatpush1.msra.mxu0 0.0
    %108 = vmatprep.subr.mxu0 0.0
    %109 = vmatpush1.msra.mxu0 0.0
    %110 = vmatprep.subr.mxu0 0.0
    %111 = vmatpush1.msra.mxu0 0.0
    %112 = vmatprep.subr.mxu0 0.0
    %113 = vmatpush1.msra.mxu0 0.0
    %114 = vmatprep.subr.mxu0 0.0
    %115 = vmatpush1.msra.mxu0 0.0
    %116 = vmatprep.subr.mxu0 0.0
    %117 = vmatpush1.msra.mxu0 0.0
    %118 = vmatprep.mubr.f32.mxu0 0.0
    %119 = vmatmul.mubr.f32.gmra.mrb[0].mxu0 %v15
    %v120 = vpop.f32.mrb[0].mxu0
    %v121 = vadd.f32 %v52, %v120
    %v122 = vpop.f32.mrb[0].mxu0
    %123 = vmatprep.mubr.f32.mxu0 0.0
    %124 = vmatmul.mubr.f32.gmra.mrb[0].mxu0 %v16
    %v125 = vpop.f32.mrb[0].mxu0
    %v126 = vadd.f32 %v52, %v125
    %v127 = vpop.f32.mrb[0].mxu0
    %128 = vmatprep.mubr.f32.mxu0 0.0
    %129 = vmatmul.mubr.f32.gmra.mrb[0].mxu0 %v17
    %v130 = vpop.f32.mrb[0].mxu0
    %v131 = vadd.f32 %v52, %v130
    %v132 = vpop.f32.mrb[0].mxu0
    %133 = vmatprep.mubr.f32.mxu0 0.0
    %134 = vmatmul.mubr.f32.gmra.mrb[0].mxu0 %v18
    %v135 = vpop.f32.mrb[0].mxu0
    %v136 = vadd.f32 %v52, %v135
    %v137 = vpop.f32.mrb[0].mxu0
    %138 = vmatprep.mubr.f32.mxu0 0.0
    %139 = vmatmul.mubr.f32.gmra.mrb[0].mxu0 %v19
    %v140 = vpop.f32.mrb[0].mxu0
    %v141 = vadd.f32 %v52, %v140
    %v142 = vpop.f32.mrb[0].mxu0
    %143 = vmatprep.mubr.f32.mxu0 0.0
    %144 = vmatmul.mubr.f32.gmra.mrb[0].mxu0 %v20
    %v145 = vpop.f32.mrb[0].mxu0
    %v146 = vadd.f32 %v52, %v145
    %v147 = vpop.f32.mrb[0].mxu0
    %148 = vmatprep.mubr.f32.mxu0 0.0
    %149 = vmatmul.mubr.f32.gmra.mrb[0].mxu0 %v21
    %v150 = vpop.f32.mrb[0].mxu0
    %v151 = vadd.f32 %v52, %v150
    %v152 = vpop.f32.mrb[0].mxu0
    %153 = vmatprep.mubr.f32.mxu0 0.0
    %154 = vmatmul.mubr.f32.gmra.mrb[0].mxu0 %v22
    %v155 = vpop.f32.mrb[0].mxu0
    %v156 = vadd.f32 %v52, %v155
    %v157 = vpop.f32.mrb[0].mxu0
    %158 = vmatprep.mubr.f32.mxu0 0.0
    %159 = vmatmul.mubr.f32.gmra.mrb[0].mxu0 %v23
    %v160 = vpop.f32.mrb[0].mxu0
    %v161 = vadd.f32 %v52, %v160
    %v162 = vpop.f32.mrb[0].mxu0
    %163 = vmatprep.mubr.f32.mxu0 0.0
    %164 = vmatmul.mubr.f32.gmra.mrb[0].mxu0 %v24
    %v165 = vpop.f32.mrb[0].mxu0
    %v166 = vadd.f32 %v52, %v165
    %v167 = vpop.f32.mrb[0].mxu0
    %168 = vmatprep.mubr.f32.mxu0 0.0
    %169 = vmatmul.mubr.f32.gmra.mrb[0].mxu0 %v25
    %v170 = vpop.f32.mrb[0].mxu0
    %v171 = vadd.f32 %v52, %v170
    %v172 = vpop.f32.mrb[0].mxu0
    %173 = vmatprep.mubr.f32.mxu0 0.0
    %174 = vmatmul.mubr.f32.gmra.mrb[0].mxu0 %v26
    %v175 = vpop.f32.mrb[0].mxu0
    %v176 = vadd.f32 %v52, %v175
    %v177 = vpop.f32.mrb[0].mxu0
    %178 = vmatprep.mubr.f32.mxu0 0.0
    %179 = vmatmul.mubr.f32.gmra.mrb[0].mxu0 %v27
    %v180 = vpop.f32.mrb[0].mxu0
    %v181 = vadd.f32 %v52, %v180
    %v182 = vpop.f32.mrb[0].mxu0
    %183 = vmatprep.mubr.f32.mxu0 0.0
    %184 = vmatmul.mubr.f32.gmra.mrb[0].mxu0 %v28
    %v185 = vpop.f32.mrb[0].mxu0
    %v186 = vadd.f32 %v52, %v185
    %v187 = vpop.f32.mrb[0].mxu0
    %188 = vmatprep.mubr.f32.mxu0 0.0
    %189 = vmatmul.mubr.f32.gmra.mrb[0].mxu0 %v29
    %v190 = vpop.f32.mrb[0].mxu0
    %v191 = vadd.f32 %v52, %v190
    %v192 = vpop.f32.mrb[0].mxu0
    %193 = vmatprep.mubr.f32.mxu0 0.0
    %194 = vmatmul.mubr.f32.gmra.mrb[0].mxu0 %v30
    %v195 = vpop.f32.mrb[0].mxu0
    %v196 = vadd.f32 %v52, %v195
    %v197 = vpop.f32.mrb[0].mxu0
    %198 = vdwg.mxu0
    %vm199 = vcmp.ge.f32.partialorder %v121, 0.0
    %vm200 = vcmp.ge.f32.partialorder %v126, 0.0
    %vm201 = vcmp.ge.f32.partialorder %v131, 0.0
    %vm202 = vcmp.ge.f32.partialorder %v136, 0.0
    %vm203 = vcmp.ge.f32.partialorder %v141, 0.0
    %vm204 = vcmp.ge.f32.partialorder %v146, 0.0
    %vm205 = vcmp.ge.f32.partialorder %v151, 0.0
    %vm206 = vcmp.ge.f32.partialorder %v156, 0.0
    %vm207 = vcmp.ge.f32.partialorder %v161, 0.0
    %vm208 = vcmp.ge.f32.partialorder %v166, 0.0
    %vm209 = vcmp.ge.f32.partialorder %v171, 0.0
    %vm210 = vcmp.ge.f32.partialorder %v176, 0.0
    %vm211 = vcmp.ge.f32.partialorder %v181, 0.0
    %vm212 = vcmp.ge.f32.partialorder %v186, 0.0
    %vm213 = vcmp.ge.f32.partialorder %v191, 0.0
    %vm214 = vcmp.ge.f32.partialorder %v196, 0.0
    %v215 = vmul.f32 %v121, 0.01
    %v216 = vmul.f32 %v126, 0.01
    %v217 = vmul.f32 %v131, 0.01
    %v218 = vmul.f32 %v136, 0.01
    %v219 = vmul.f32 %v141, 0.01
    %v220 = vmul.f32 %v146, 0.01
    %v221 = vmul.f32 %v151, 0.01
    %v222 = vmul.f32 %v156, 0.01
    %v223 = vmul.f32 %v161, 0.01
    %v224 = vmul.f32 %v166, 0.01
    %v225 = vmul.f32 %v171, 0.01
    %v226 = vmul.f32 %v176, 0.01
    %v227 = vmul.f32 %v181, 0.01
    %v228 = vmul.f32 %v186, 0.01
    %v229 = vmul.f32 %v191, 0.01
    %v230 = vmul.f32 %v196, 0.01
    %v231 = vsel %vm199, %v121, %v215
    %v232 = vsel %vm200, %v126, %v216
    %v233 = vsel %vm201, %v131, %v217
    %v234 = vsel %vm202, %v136, %v218
    %v235 = vsel %vm203, %v141, %v219
    %v236 = vsel %vm204, %v146, %v220
    %v237 = vsel %vm205, %v151, %v221
    %v238 = vsel %vm206, %v156, %v222
    %v239 = vsel %vm207, %v161, %v223
    %v240 = vsel %vm208, %v166, %v224
    %v241 = vsel %vm209, %v171, %v225
    %v242 = vsel %vm210, %v176, %v226
    %v243 = vsel %vm211, %v181, %v227
    %v244 = vsel %vm212, %v186, %v228
    %v245 = vsel %vm213, %v191, %v229
    %v246 = vsel %vm214, %v196, %v230
    %247 = vst [vmem:[#allocation2] sm:$0xff] %v231
    %248 = vst [vmem:[#allocation2 + $0x8] sm:$0xff] %v232
    %249 = vst [vmem:[#allocation2 + $0x10] sm:$0xff] %v233
    %250 = vst [vmem:[#allocation2 + $0x18] sm:$0xff] %v234
    %251 = vst [vmem:[#allocation2 + $0x20] sm:$0xff] %v235
    %252 = vst [vmem:[#allocation2 + $0x28] sm:$0xff] %v236
    %253 = vst [vmem:[#allocation2 + $0x30] sm:$0xff] %v237
    %254 = vst [vmem:[#allocation2 + $0x38] sm:$0xff] %v238
    %255 = vst [vmem:[#allocation2 + $0x40] sm:$0xff] %v239
    %256 = vst [vmem:[#allocation2 + $0x48] sm:$0xff] %v240
    %257 = vst [vmem:[#allocation2 + $0x50] sm:$0xff] %v241
    %258 = vst [vmem:[#allocation2 + $0x58] sm:$0xff] %v242
    %259 = vst [vmem:[#allocation2 + $0x60] sm:$0xff] %v243
    %260 = vst [vmem:[#allocation2 + $0x68] sm:$0xff] %v244
    %261 = vst [vmem:[#allocation2 + $0x70] sm:$0xff] %v245
    %262 = vst [vmem:[#allocation2 + $0x78] sm:$0xff] %v246
    // Predicated region
    $region14: #{conv2d_act.1} parent=1 // pred_check
      _
    $region15: #{conv2d_act.1} parent=1 // pred_check_branch
      %264 = sbr.rel (0) target = $region17
    $region16: #{conv2d_act.1} parent=1 // pred_region
      %s266 = ssub.s32 2048, 2048
      %267 = vsyncadd [#allocation3], %s266
      %s268 = sshll.u32 [#allocation2], 4
      %s269 = int_to_ptr.vmem [resolvable:$true] %s268
      %274 = dma.vmem_to_hbm [thread:$0]  %s269, 2048, %s3, [#allocation3], 128, 128, 8
    $region17: #{conv2d_act.1} parent=1 // pred_fallthru
      _
    // Predicated region
    $region18: #{conv2d_act.1} parent=1 // pred_check
      _
    $region19: #{conv2d_act.1} parent=1 // pred_check_branch
      %276 = sbr.rel (0) target = $region21
    $region20: #{conv2d_act.1} parent=1 // pred_region
      %277 = dma.done [#allocation3], 2048
    $region21: #{conv2d_act.1} parent=1 // pred_fallthru
      _
    %278 = vsyncpa [#allocation3], 1

</llo_original>
